<compile_context>
chip_gen: v7x
topology: tpu7x:2x2x1
jax: 0.10.0
libtpu: 0.0.40
codegen_flags: <defaults>
</compile_context>

<pallas_src>
import functools
import math

import jax
import jax.numpy as jnp
from jax.experimental import pallas as pl
from jax.experimental.pallas import tpu as pltpu


def _pe_add_kernel(x_ref, inv_freq_ref, phase_ref, o_ref, *, seq_tile: int, fold: int):
    ts, _ = x_ref.shape  # (seq_tile_rows, lane_width)

    # Global (folded) sequence base position of every row in this block, as a
    # (ts, 1) f32 column; the intra-row fold offset lives in phase_ref.
    row = jax.lax.broadcasted_iota(jnp.int32, (ts, 1), 0)
    pos = ((row + pl.program_id(0) * seq_tile) * fold).astype(jnp.float32)

    # angle = pos * inv_freq + phase ; phase = fold_offset*inv_freq + (pi/2)*is_cos_lane
    angle = pos * inv_freq_ref[...] + phase_ref[...]
    pe = jnp.sin(angle)                               # single transcendental

    o_ref[...] = x_ref[...] + pe.astype(o_ref.dtype)  # bf16 stays bf16


def _choose_fold(seq_len: int, batch: int, d_model: int, max_fold: int = 8) -> int:
    """Fold F sequence rows into the lane axis so the lane width is a multiple
    of 128 (unmasked, lane-dense stores). F must divide seq_len."""
    bd = batch * d_model
    if bd % 128 == 0:
        return 1
    for f in range(2, max_fold + 1):
        if seq_len % f == 0 and (f * bd) % 128 == 0:
            return f
    return 1


def _choose_seq_tile(n_rows: int, lane_width: int, itemsize: int,
                     vmem_budget_bytes: int = 12 * 1024 * 1024) -> int:
    """Largest multiple-of-8 row tile so the double-buffered x + out blocks fit
    a conservative VMEM budget (safe for v7x's 64 MiB), with >= 2 grid steps
    whenever the sequence allows (pipelining + v7x megacore sharding)."""
    per_row = 4 * lane_width * itemsize              # 2 arrays x 2 pipeline buffers
    ts = max(8, (vmem_budget_bytes // max(per_row, 1)) // 8 * 8)
    ts = min(ts, 1024)                               # amortize ~0.35us/step, cap DMA size
    if n_rows >= 16:
        half = ((-(-n_rows // 2)) + 7) // 8 * 8      # ceil(n/2) rounded up to mult of 8
        ts = min(ts, half)
    return n_rows if ts >= n_rows else ts


def positional_encoding_forward(x: jnp.ndarray) -> jnp.ndarray:
    """x: (S, B, D). Returns x + pe[:S]; pe is generated in-kernel."""
    S, B, D = x.shape
    fold = _choose_fold(S, B, D)
    n_rows = S // fold
    L = fold * B * D
    x2 = x.reshape(n_rows, L)                        # free row-major reshape

    # --- tiny sequence-invariant lane tables, precomputed once in XLA -------
    lane = jnp.arange(L, dtype=jnp.int32)
    d_idx = lane % D
    parity = (d_idx % 2).astype(jnp.float32)                       # 0=sin, 1=cos
    even_idx = (d_idx - (d_idx % 2)).astype(jnp.float32)           # 2*(d//2)
    inv_freq = jnp.exp(even_idx * (-math.log(10000.0) / D))        # div_term per lane
    fold_off = (lane // (B * D)).astype(jnp.float32)               # seq offset inside row
    phase = fold_off * inv_freq + (math.pi / 2.0) * parity
    inv_freq = inv_freq.reshape(1, L)
    phase = phase.reshape(1, L)

    ts = _choose_seq_tile(n_rows, L, x.dtype.itemsize)
    grid = (pl.cdiv(n_rows, ts),)

    out = pl.pallas_call(
        functools.partial(_pe_add_kernel, seq_tile=ts, fold=fold),
        out_shape=jax.ShapeDtypeStruct((n_rows, L), x.dtype),
        grid_spec=pltpu.PrefetchScalarGridSpec(
            num_scalar_prefetch=0,
            grid=grid,
            in_specs=[
                pl.BlockSpec((ts, L), lambda i: (i, 0)),   # x tile
                pl.BlockSpec((1, L), lambda i: (0, 0)),    # inv_freq (VMEM-resident)
                pl.BlockSpec((1, L), lambda i: (0, 0)),    # phase    (VMEM-resident)
            ],
            out_specs=pl.BlockSpec((ts, L), lambda i: (i, 0)),
        ),
        compiler_params=pltpu.CompilerParams(
            dimension_semantics=("parallel",),
            vmem_limit_bytes=32 * 1024 * 1024,
        ),
    )(x2, inv_freq, phase)
    return out.reshape(S, B, D)


def make_positional_encoding_table(d_model: int, max_len: int = 5000) -> jnp.ndarray:
    """Reference pe buffer (identical to the PyTorch __init__ construction).
    Returns shape (max_len, 1, d_model), float32."""
    position = jnp.arange(max_len, dtype=jnp.float32)[:, None]
    div_term = jnp.exp(
        jnp.arange(0, d_model, 2, dtype=jnp.float32) * (-math.log(10000.0) / d_model)
    )
    angles = position * div_term
    pe = jnp.zeros((max_len, d_model), dtype=jnp.float32)
    pe = pe.at[:, 0::2].set(jnp.sin(angles))
    pe = pe.at[:, 1::2].set(jnp.cos(angles))
    return pe[:, None, :]


if __name__ == "__main__":
    key = jax.random.PRNGKey(0)

    # Case 1: B*D = 64 (not lane-dense) -> fold=2 gives lane width 128, 2 grid steps.
    S, B, D = 48, 2, 32
    x = jax.random.normal(key, (S, B, D), dtype=jnp.float32)
    out = jax.block_until_ready(positional_encoding_forward(x))
    ref = x + make_positional_encoding_table(D, max_len=64)[:S]
    assert out.shape == (S, B, D)
    assert jnp.allclose(out, ref, atol=1e-4, rtol=1e-5), float(jnp.max(jnp.abs(out - ref)))

    # Case 2: B*D = 128 already lane-dense -> fold=1 path, 2 grid steps.
    S2, B2, D2 = 16, 2, 64
    x2 = jax.random.normal(jax.random.PRNGKey(1), (S2, B2, D2), dtype=jnp.float32)
    out2 = jax.block_until_ready(positional_encoding_forward(x2))
    ref2 = x2 + make_positional_encoding_table(D2, max_len=32)[:S2]
    assert jnp.allclose(out2, ref2, atol=1e-4, rtol=1e-5), float(jnp.max(jnp.abs(out2 - ref2)))

    print("KERNEL_OK")
</pallas_src>

<mosaic_0001>
module attributes {stable_mosaic.version = 11 : i64} {
  func.func @_pe_add_kernel(%arg0: i32, %arg1: memref<16x128xf32, #tpu.memory_space<vmem>>, %arg2: memref<1x128xf32, #tpu.memory_space<vmem>>, %arg3: memref<1x128xf32, #tpu.memory_space<vmem>>, %arg4: memref<16x128xf32, #tpu.memory_space<vmem>>) attributes {dimension_semantics = [#tpu.dimension_semantics<parallel>], iteration_bounds = array<i64: 2>, scalar_prefetch = 0 : i64, scratch_operands = 0 : i64, tpu.core_type = #tpu.core_type<tc>, window_params = [{transform_indices = @transform_0, window_bounds = array<i64: 16, 128>}, {pipeline_mode = #tpu.pipeline_mode<synchronous>, transform_indices = @transform_1, window_bounds = array<i64: 1, 128>}, {pipeline_mode = #tpu.pipeline_mode<synchronous>, transform_indices = @transform_2, window_bounds = array<i64: 1, 128>}, {transform_indices = @transform_3, window_bounds = array<i64: 16, 128>}]} {
    %0 = tpu.iota {dimensions = array<i32: 0>} : vector<16x1xi32>
    %c16_i32 = arith.constant 16 : i32
    %1 = arith.muli %arg0, %c16_i32 : i32
    %2 = vector.broadcast %1 : i32 to vector<16x1xi32>
    %3 = arith.addi %0, %2 : vector<16x1xi32>
    %c2_i32 = arith.constant 2 : i32
    %4 = vector.broadcast %c2_i32 : i32 to vector<16x1xi32>
    %5 = arith.muli %3, %4 : vector<16x1xi32>
    %6 = arith.sitofp %5 : vector<16x1xi32> to vector<16x1xf32>
    %c0 = arith.constant 0 : index
    %c0_0 = arith.constant 0 : index
    %7 = vector.load %arg2[%c0, %c0_0] : memref<1x128xf32, #tpu.memory_space<vmem>>, vector<1x128xf32>
    %8 = vector.broadcast %6 : vector<16x1xf32> to vector<16x128xf32>
    %9 = vector.broadcast %7 : vector<1x128xf32> to vector<16x128xf32>
    %10 = arith.mulf %8, %9 : vector<16x128xf32>
    %c0_1 = arith.constant 0 : index
    %c0_2 = arith.constant 0 : index
    %11 = vector.load %arg3[%c0_1, %c0_2] : memref<1x128xf32, #tpu.memory_space<vmem>>, vector<1x128xf32>
    %12 = vector.broadcast %11 : vector<1x128xf32> to vector<16x128xf32>
    %13 = arith.addf %10, %12 : vector<16x128xf32>
    %14 = math.sin %13 : vector<16x128xf32>
    %c0_3 = arith.constant 0 : index
    %c0_4 = arith.constant 0 : index
    %15 = vector.load %arg1[%c0_3, %c0_4] : memref<16x128xf32, #tpu.memory_space<vmem>>, vector<16x128xf32>
    %16 = arith.addf %15, %14 : vector<16x128xf32>
    %c0_5 = arith.constant 0 : index
    %c0_6 = arith.constant 0 : index
    %17 = vector.load %arg4[%c0_5, %c0_6] : memref<16x128xf32, #tpu.memory_space<vmem>>, vector<16x128xf32>
    tpu.vector_store %arg4[%c0_5, %c0_6], %16 {strides = array<i32>} : memref<16x128xf32, #tpu.memory_space<vmem>>, vector<16x128xf32>,
    return
  }
  func.func @transform_0(%arg0: i32) -> (i32, i32) {
    %c0_i32 = arith.constant 0 : i32
    %c0_i32_0 = arith.constant 0 : i32
    return %arg0, %c0_i32 : i32, i32
  }
  func.func @transform_1(%arg0: i32) -> (i32, i32) {
    %c0_i32 = arith.constant 0 : i32
    %c0_i32_0 = arith.constant 0 : i32
    %c0_i32_1 = arith.constant 0 : i32
    return %c0_i32, %c0_i32_0 : i32, i32
  }
  func.func @transform_2(%arg0: i32) -> (i32, i32) {
    %c0_i32 = arith.constant 0 : i32
    %c0_i32_0 = arith.constant 0 : i32
    %c0_i32_1 = arith.constant 0 : i32
    return %c0_i32, %c0_i32_0 : i32, i32
  }
  func.func @transform_3(%arg0: i32) -> (i32, i32) {
    %c0_i32 = arith.constant 0 : i32
    %c0_i32_0 = arith.constant 0 : i32
    return %arg0, %c0_i32 : i32, i32
  }
}

</mosaic_0001>

<llo_original>
// kernel: tpu_custom_call.1
$region0: #{tpu_custom_call.1}
  #allocation0 [shape = 'u32[]', space=smem, size = 0x4, offset = 0x4, fixed_abs, tag = 'smem constant byte address 0x4 - core index']
  #allocation1 [shape = 'u32[144,128]{1,0:T(1,128)}', space=vmem, size = 0x12000, scoped, tag = 'internal scratch']
  %s0 = inlined_call_operand.hbm [shape: f32[24,128], index: 0, kind: input, shape index: {}]
  %s1 = inlined_call_operand.vmem [shape: f32[1,128], index: 1, kind: input, shape index: {}]
  %s2 = inlined_call_operand.vmem [shape: f32[1,128], index: 2, kind: input, shape index: {}]
  %s3 = inlined_call_operand.hbm [shape: f32[24,128], index: 3, kind: output, shape index: {}]
  %s4 = sld [smem:[#allocation0]]
  $region49: #{tpu_custom_call.1} parent=0
    _
  %s6 = ssub.s32 1, %s4
  %s7 = scalar_select 0, %s6, %s4
  $region1: #{tpu_custom_call.1} parent=0
    #allocation2 [shape = 'u8[16384]{0}', space=vmem, size = 0x4000, scoped, tag = 'input window, operand 0']
    #allocation3 [shape = 's32[2]{0}', space=sflag, size = 0x8, scoped, tag = 'scoped memory for tpu_custom_call.1']
    #allocation4 [shape = 's32[2]{0}', space=sflag, size = 0x8, scoped, tag = 'scoped memory for tpu_custom_call.1']
    #allocation5 [shape = 'u8[16384]{0}', space=vmem, size = 0x4000, scoped, tag = 'output window, operand 0']
    %8 = vsyncpa [#allocation3], 0
    %s9 = scalar_lea.sflag [#allocation3], 1
    %10 = vsyncpa %s9, 0
    %11 = vsyncpa [#allocation4], 0
    %s12 = scalar_lea.sflag [#allocation4], 1
    %13 = vsyncpa %s12, 0
    loop: start=0, step=1, limit=4
    $region2: #{tpu_custom_call.1} parent=1 // loop_pre_header
      _
    $region3: #{tpu_custom_call.1} parent=1 // loop_header
      %s15 = sphi 0, %s19
      %p16 = scmp.ge.s32.totalorder %s15, 4
      %s25 = sphi 0, %s27
      %s28 = sphi 0, %s25
      %s29 = sphi 0, %s28
      %s45 = sphi 0, %s29
      %s49 = sphi 0, %s49
      %s51 = sphi 0, %s49
      %s52 = sphi 0, %s51
      %s66 = sphi 0, %s52
      %s70 = sphi 0, %s70
      %s72 = sphi 0, %s70
      %s73 = sphi 0, %s72
      %s87 = sphi 0, %s73
      %s93 = sphi 0, %s95
      %s96 = sphi 0, %s93
      %s97 = sphi 0, %s96
      %s113 = sphi 0, %s97
    $region4: #{tpu_custom_call.1} parent=1 // loop_header_branch
      %18 = sbr.rel (%p16) target = $region8
    $region5: #{tpu_custom_call.1} parent=1 // loop_body
      %s20 = ssub.s32 %s15, 1
      %s21 = ssub.s32 %s15, 2
      %s22 = sadd.s32 %s15, 1
      %s23 = ssub.s32 %s15, %s22
      %p24 = scmp.eq.s32.totalorder %s23, 0
      %s26 = sadd.s32 %s25, 1
      %s27 = scalar_select %p24, %s25, %s26
      %p30 = pneg %p24
      %p31 = scmp.eq.s32.totalorder %s15, 1
      %p32 = por %p30, %p31
      %p33 = scmp.ne.s32.totalorder %s25, %s28
      %p34 = scmp.eq.s32.totalorder %s15, 0
      %p35 = por %p33, %p34
      %p36 = scmp.ne.s32.totalorder %s25, %s28
      %p37 = scmp.eq.s32.totalorder %s20, 1
      %p38 = por %p36, %p37
      %p39 = scmp.ne.s32.totalorder %s28, %s29
      %p40 = scmp.eq.s32.totalorder %s20, 0
      %p41 = por %p39, %p40
      %p42 = scmp.ne.s32.totalorder %s28, %s29
      %p43 = scmp.eq.s32.totalorder %s21, 1
      %p44 = por %p42, %p43
      %p46 = scmp.ne.s32.totalorder %s29, %s45
      %p47 = scmp.eq.s32.totalorder %s21, 0
      %p48 = por %p46, %p47
      %s50 = sadd.s32 %s49, 1
      %p53 = scmp.eq.s32.totalorder %s15, 1
      %p54 = scmp.ne.s32.totalorder %s49, %s51
      %p55 = scmp.eq.s32.totalorder %s15, 0
      %p56 = por %p54, %p55
      %p57 = scmp.ne.s32.totalorder %s49, %s51
      %p58 = scmp.eq.s32.totalorder %s20, 1
      %p59 = por %p57, %p58
      %p60 = scmp.ne.s32.totalorder %s51, %s52
      %p61 = scmp.eq.s32.totalorder %s20, 0
      %p62 = por %p60, %p61
      %p63 = scmp.ne.s32.totalorder %s51, %s52
      %p64 = scmp.eq.s32.totalorder %s21, 1
      %p65 = por %p63, %p64
      %p67 = scmp.ne.s32.totalorder %s52, %s66
      %p68 = scmp.eq.s32.totalorder %s21, 0
      %p69 = por %p67, %p68
      %s71 = sadd.s32 %s70, 1
      %p74 = scmp.eq.s32.totalorder %s15, 1
      %p75 = scmp.ne.s32.totalorder %s70, %s72
      %p76 = scmp.eq.s32.totalorder %s15, 0
      %p77 = por %p75, %p76
      %p78 = scmp.ne.s32.totalorder %s70, %s72
      %p79 = scmp.eq.s32.totalorder %s20, 1
      %p80 = por %p78, %p79
      %p81 = scmp.ne.s32.totalorder %s72, %s73
      %p82 = scmp.eq.s32.totalorder %s20, 0
      %p83 = por %p81, %p82
      %p84 = scmp.ne.s32.totalorder %s72, %s73
      %p85 = scmp.eq.s32.totalorder %s21, 1
      %p86 = por %p84, %p85
      %p88 = scmp.ne.s32.totalorder %s73, %s87
      %p89 = scmp.eq.s32.totalorder %s21, 0
      %p90 = por %p88, %p89
      %s91 = ssub.s32 %s15, %s22
      %p92 = scmp.eq.s32.totalorder %s91, 0
      %s94 = sadd.s32 %s93, 1
      %s95 = scalar_select %p92, %s93, %s94
      %p98 = pneg %p92
      %p99 = scmp.eq.s32.totalorder %s15, 1
      %p100 = por %p98, %p99
      %p101 = scmp.ne.s32.totalorder %s93, %s96
      %p102 = scmp.eq.s32.totalorder %s15, 0
      %p103 = por %p101, %p102
      %p104 = scmp.ne.s32.totalorder %s93, %s96
      %p105 = scmp.eq.s32.totalorder %s20, 1
      %p106 = por %p104, %p105
      %p107 = scmp.ne.s32.totalorder %s96, %s97
      %p108 = scmp.eq.s32.totalorder %s20, 0
      %p109 = por %p107, %p108
      %p110 = scmp.ne.s32.totalorder %s96, %s97
      %p111 = scmp.eq.s32.totalorder %s21, 1
      %p112 = por %p110, %p111
      %p114 = scmp.ne.s32.totalorder %s97, %s113
      %p115 = scmp.eq.s32.totalorder %s21, 0
      %p116 = por %p114, %p115
      %p117 = scmp.le.s32.totalorder 1, %s15
      %p118 = scmp.lt.s32.totalorder %s15, 3
      %p119 = pnand %p117, %p118
      %p120 = pneg %p119
      // Predicated region
      $region9: #{tpu_custom_call.1} parent=5 // pred_check
        _
      $region10: #{tpu_custom_call.1} parent=5 // pred_check_branch
        %122 = sbr.rel (%p119) target = $region12
      $region11: #{tpu_custom_call.1} parent=5 // pred_region
        %s123 = ssub.s32 %s15, 1
        // Predicated region
        $region13: #{tpu_custom_call.1} parent=11 // pred_check
          %p124 = pneg %p62
        $region14: #{tpu_custom_call.1} parent=11 // pred_check_branch
          %126 = sbr.rel (%p124) target = $region16
        $region15: #{tpu_custom_call.1} parent=11 // pred_region
          _
        $region16: #{tpu_custom_call.1} parent=11 // pred_fallthru
          _
        // Predicated region
        $region17: #{tpu_custom_call.1} parent=11 // pred_check
          %p127 = pneg %p83
        $region18: #{tpu_custom_call.1} parent=11 // pred_check_branch
          %129 = sbr.rel (%p127) target = $region20
        $region19: #{tpu_custom_call.1} parent=11 // pred_region
          _
        $region20: #{tpu_custom_call.1} parent=11 // pred_fallthru
          _
      $region12: #{tpu_custom_call.1} parent=5 // pred_fallthru
        _
      %p130 = scmp.lt.s32.totalorder %s15, 2
      // Predicated region
      $region21: #{tpu_custom_call.1} parent=5 // pred_check
        %p131 = pneg %p130
      $region22: #{tpu_custom_call.1} parent=5 // pred_check_branch
        %133 = sbr.rel (%p131) target = $region24
      $region23: #{tpu_custom_call.1} parent=5 // pred_region
        // Predicated region
        $region25: #{tpu_custom_call.1} parent=23 // pred_check
          %p134 = pneg %p35
        $region26: #{tpu_custom_call.1} parent=23 // pred_check_branch
          %136 = sbr.rel (%p134) target = $region28
        $region27: #{tpu_custom_call.1} parent=23 // pred_region
          %s137 = sand.u32 %s25, 1
          %s138 = scalar_lea.sflag [#allocation3], %s137
          %s139 = sand.u32 %s25, 1
          %s140 = smul.addr %s139, 16
          %s141 = scalar_lea.vmem [#allocation2], %s140
          %s142 = smul.u32 2, %s15
          %s143 = ssub.s32 3, %s142
          %p144 = scmp.lt.s32.totalorder %s143, 2
          %s145 = scalar_select %p144, %s143, 2
          %s146 = smul.u32 128, %s145
          %s148 = ssub.s32 256, %s146
          %149 = vsyncadd %s138, %s148
          %p150 = scmp.ne.s32.totalorder 0, %s146
          %s151 = smul.addr %s142, 128
          %s152 = scalar_lea.hbm %s0, %s151
          %s153 = smul.u32 8, %s145
          %s154 = sshll.u32 %s141, 4
          %s155 = int_to_ptr.vmem [resolvable:$true] %s154
          %s156 = sshll.u32 %s153, 4
          %160 = dma.hbm_to_vmem [thread:$0]  (%p150), %s152, %s156, %s155, %s138, 128, 128, 8
        $region28: #{tpu_custom_call.1} parent=23 // pred_fallthru
          _
      $region24: #{tpu_custom_call.1} parent=5 // pred_fallthru
        _
      %p161 = scmp.le.s32.totalorder 1, %s15
      %p162 = scmp.lt.s32.totalorder %s15, 3
      %p163 = pnand %p161, %p162
      %p164 = pneg %p163
      // Predicated region
      $region29: #{tpu_custom_call.1} parent=5 // pred_check
        _
      $region30: #{tpu_custom_call.1} parent=5 // pred_check_branch
        %166 = sbr.rel (%p163) target = $region32
      $region31: #{tpu_custom_call.1} parent=5 // pred_region
        %s167 = ssub.s32 %s15, 1
        %s168 = sand.u32 %s28, 1
        %s169 = scalar_lea.sflag [#allocation3], %s168
        %s170 = sand.u32 %s28, 1
        %s171 = smul.addr %s170, 16
        %s172 = scalar_lea.vmem [#allocation2], %s171
        // Predicated region
        $region33: #{tpu_custom_call.1} parent=31 // pred_check
          %p173 = pneg %p41
        $region34: #{tpu_custom_call.1} parent=31 // pred_check_branch
          %175 = sbr.rel (%p173) target = $region36
        $region35: #{tpu_custom_call.1} parent=31 // pred_region
          %176 = dma.done %s169, 256
        $region36: #{tpu_custom_call.1} parent=31 // pred_fallthru
          _
        %s177 = sand.u32 %s28, 1
        %s178 = scalar_lea.sflag [#allocation3], %s177
        %s179 = sand.u32 %s28, 1
        %s180 = smul.addr %s179, 16
        %s181 = scalar_lea.vmem [#allocation2], %s180
        %p182 = pneg %p41
        %p183 = pneg %p38
        %p184 = pneg %p62
        %p185 = pneg %p59
        %p186 = pneg %p83
        %p187 = pneg %p80
        %p188 = pneg %p109
        %p189 = pneg %p106
        %s190 = sand.u32 %s96, 1
        %s191 = scalar_lea.sflag [#allocation4], %s190
        %s192 = sand.u32 %s96, 1
        %s193 = smul.addr %s192, 16
        %s194 = scalar_lea.vmem [#allocation5], %s193
        %s195 = smul.u32 2, %s20
        %s196 = ssub.s32 3, %s195
        %p197 = scmp.lt.s32.totalorder %s196, 2
        %s198 = scalar_select %p197, %s196, 2
        %s199 = smul.u32 128, %s198
        %s200 = smul.u32 2, %s20
        %s201 = ssub.s32 3, %s200
        %p202 = scmp.lt.s32.totalorder %s201, 2
        %s203 = scalar_select %p202, %s201, 2
        %s204 = smul.u32 128, %s203
        %v205 = vlaneseq
        %v206 = vshrl.u32 %v205, 7
        %v207 = vadd.s32 %v206, 8
        %s208 = smul.u32 %s20, 16
        %v209 = vstv %s208
        %v210 = vadd.s32 %v206, %v209
        %v211 = vadd.s32 %v207, %v209
        %v212 = vmul.u32 %v210, 2
        %v213 = vmul.u32 %v211, 2
        %v214 = vcvt.s32.f32 %v212
        %v215 = vcvt.s32.f32 %v213
        %v216 = vld [vmem:[%s1] sm:$0x1]
        %v218 = vlaneseq
        %v219 = vshrl.u32 %v218, 7
        %v220 = vsub.s32 0, %v219
        %v221 = vrot.slane %v216, %v220
        %v223 = vmul.f32 %v214, %v221
        %v224 = vmul.f32 %v215, %v221
        %v225 = vld [vmem:[%s2] sm:$0x1]
        %v227 = vlaneseq
        %v228 = vshrl.u32 %v227, 7
        %v229 = vsub.s32 0, %v228
        %v230 = vrot.slane %v225, %v229
        %v232 = vadd.f32 %v223, %v230
        %v233 = vadd.f32 %v224, %v230
        %v234 = vand.u32 2147483647, %v232
        %vm235 = vcmp.le.f32.partialorder %v234, 0.7853982
        %vm236 = vcmp.lt.s32.totalorder %v232, 0
        %v237 = vand.u32 %v232, 2139095040
        %v238 = vshrl.u32 %v237, 23
        %v239 = vsub.s32 %v238, 127
        %v240 = vand.u32 2147483647, %v232
        %v241 = vand.u32 %v240, 8388607
        %v242 = vor.u32 %v241, 8388608
        %v243 = vsub.s32 0, %v242
        %v244 = vadd.s32 %v239, 1
        %vm245 = vcmp.gt.s32.totalorder %v244, 0
        %v246 = vsel %vm245, %v244, 0
        %v247 = vshrl.u32 %v246, 5
        %v248 = vand.u32 %v246, 31
        %v249 = vsub.s32 32, %v248
        %v250 = vshrl.u32 683565275, %v249
        %v251 = vshll.u32 683565275, %v248
        %v252 = vshrl.u32 2475754826, %v249
        %v253 = vor.u32 %v251, %v252
        %v254 = vshll.u32 2475754826, %v248
        %v255 = vshrl.u32 2131351028, %v249
        %v256 = vor.u32 %v254, %v255
        %v257 = vshll.u32 2131351028, %v248
        %v258 = vshrl.u32 2102212464, %v249
        %v259 = vor.u32 %v257, %v258
        %v260 = vshll.u32 2102212464, %v248
        %v261 = vshrl.u32 920167782, %v249
        %v262 = vor.u32 %v260, %v261
        %v263 = vshll.u32 920167782, %v248
        %v264 = vshrl.u32 1326507024, %v249
        %v265 = vor.u32 %v263, %v264
        %vm266 = vcmp.lt.s32.totalorder %v247, 1
        %vm267 = vcmp.lt.s32.totalorder %v247, 2
        %vm268 = vcmp.lt.s32.totalorder %v247, 3
        %vm269 = vcmp.lt.s32.totalorder %v247, 4
        %v270 = vsel %vm266, %v250, %v253
        %v271 = vsel %vm269, %v259, 2102212464
        %v272 = vsel %vm268, %v256, %v271
        %v273 = vsel %vm267, %v270, %v272
        %v274 = vsel %vm266, %v253, %v256
        %v275 = vsel %vm269, %v262, 920167782
        %v276 = vsel %vm268, %v259, %v275
        %v277 = vsel %vm267, %v274, %v276
        %v278 = vsel %vm266, %v256, %v259
        %v279 = vsel %vm269, %v265, 1326507024
        %v280 = vsel %vm268, %v262, %v279
        %v281 = vsel %vm267, %v278, %v280
        %v282 = vshll.u32 %v242, 8
        %v283 = vmul.u32.u64.compose %v282, %v281
        %v284 = vextract.low.u32 %v283
        %v285 = vextract.high.u32 %v283
        %v286 = vmul.u32.u64.compose %v282, %v277
        %v287 = vextract.low.u32 %v286
        %v288 = vextract.high.u32 %v286
        %v289 = vmul.u32 %v282, %v273
        %v290 = vadd.s32 %v285, %v287
        %vm291 = vc.u32 %v285, %v287
        %v292 = vadd.s32 %v288, 1
        %v293 = vsel %vm291, %v292, %v288
        %v294 = vadd.s32 %v289, %v293
        %v295 = vadd.s32 %v294, 536870912
        %v296 = vshrl.u32 %v295, 30
        %v297 = vshll.u32 %v296, 30
        %v298 = vsub.s32 %v294, %v297
        %vm299 = vcmp.lt.s32.totalorder %v298, 0
        %v300 = vsub.s32 0, %v298
        %v301 = vsel %vm299, %v300, %v298
        %v302 = vclz %v301
        %v303 = vsub.s32 %v302, 2
        %vm304 = vcmp.gt.s32.totalorder 0, %v303
        %v305 = vsel %vm304, 0, %v303
        %v306 = vsub.s32 32, %v305
        %v307 = vshll.u32 %v298, %v305
        %v308 = vshrl.u32 %v290, %v306
        %v309 = vor.u32 %v307, %v308
        %v310 = vsub.s32 4294967266, %v305
        %v311 = vadd.s32 %v310, 127
        %v312 = vshll.u32 %v311, 23
        %v313 = vor.u32 4788187, %v312
        %v314 = vand.u32 2147483647, %v313
        %v316 = vcvt.s32.f32 %v309
        %v317 = vmul.f32 %v316, %v314
        %v318 = vxor.u32 %v317, 2147483648
        %v319 = vsel %vm236, %v318, %v317
        %v320 = vsub.s32 4, %v296
        %v321 = vsel %vm236, %v320, %v296
        %v322 = vsel %vm235, %v232, %v319
        %v323 = vsel %vm235, 0, %v321
        %v324 = vcosq.f32.pop %v322
        %v325 = vsinq.f32.pop %v322
        %vm326 = vweird.f32 %v232
        %v327 = vadd.s32 %v323, 3
        %v328 = vand.u32 %v327, 3
        %vm329 = vcmp.lt.s32.totalorder %v328, 2
        %vm330 = vcmp.eq.s32.totalorder %v328, 0
        %v331 = vxor.u32 %v325, 2147483648
        %v332 = vsel %vm330, %v324, %v331
        %vm333 = vcmp.eq.s32.totalorder %v328, 2
        %v334 = vxor.u32 %v324, 2147483648
        %v335 = vsel %vm333, %v334, %v325
        %v336 = vsel %vm329, %v332, %v335
        %v337 = vsel %vm326, nan, %v336
        %v338 = vand.u32 2147483647, %v233
        %vm339 = vcmp.le.f32.partialorder %v338, 0.7853982
        %vm340 = vcmp.lt.s32.totalorder %v233, 0
        %v341 = vand.u32 %v233, 2139095040
        %v342 = vshrl.u32 %v341, 23
        %v343 = vsub.s32 %v342, 127
        %v344 = vand.u32 2147483647, %v233
        %v345 = vand.u32 %v344, 8388607
        %v346 = vor.u32 %v345, 8388608
        %v347 = vsub.s32 0, %v346
        %v348 = vadd.s32 %v343, 1
        %vm349 = vcmp.gt.s32.totalorder %v348, 0
        %v350 = vsel %vm349, %v348, 0
        %v351 = vshrl.u32 %v350, 5
        %v352 = vand.u32 %v350, 31
        %v353 = vsub.s32 32, %v352
        %v354 = vshrl.u32 683565275, %v353
        %v355 = vshll.u32 683565275, %v352
        %v356 = vshrl.u32 2475754826, %v353
        %v357 = vor.u32 %v355, %v356
        %v358 = vshll.u32 2475754826, %v352
        %v359 = vshrl.u32 2131351028, %v353
        %v360 = vor.u32 %v358, %v359
        %v361 = vshll.u32 2131351028, %v352
        %v362 = vshrl.u32 2102212464, %v353
        %v363 = vor.u32 %v361, %v362
        %v364 = vshll.u32 2102212464, %v352
        %v365 = vshrl.u32 920167782, %v353
        %v366 = vor.u32 %v364, %v365
        %v367 = vshll.u32 920167782, %v352
        %v368 = vshrl.u32 1326507024, %v353
        %v369 = vor.u32 %v367, %v368
        %vm370 = vcmp.lt.s32.totalorder %v351, 1
        %vm371 = vcmp.lt.s32.totalorder %v351, 2
        %vm372 = vcmp.lt.s32.totalorder %v351, 3
        %vm373 = vcmp.lt.s32.totalorder %v351, 4
        %v374 = vsel %vm370, %v354, %v357
        %v375 = vsel %vm373, %v363, 2102212464
        %v376 = vsel %vm372, %v360, %v375
        %v377 = vsel %vm371, %v374, %v376
        %v378 = vsel %vm370, %v357, %v360
        %v379 = vsel %vm373, %v366, 920167782
        %v380 = vsel %vm372, %v363, %v379
        %v381 = vsel %vm371, %v378, %v380
        %v382 = vsel %vm370, %v360, %v363
        %v383 = vsel %vm373, %v369, 1326507024
        %v384 = vsel %vm372, %v366, %v383
        %v385 = vsel %vm371, %v382, %v384
        %v386 = vshll.u32 %v346, 8
        %v387 = vmul.u32.u64.compose %v386, %v385
        %v388 = vextract.low.u32 %v387
        %v389 = vextract.high.u32 %v387
        %v390 = vmul.u32.u64.compose %v386, %v381
        %v391 = vextract.low.u32 %v390
        %v392 = vextract.high.u32 %v390
        %v393 = vmul.u32 %v386, %v377
        %v394 = vadd.s32 %v389, %v391
        %vm395 = vc.u32 %v389, %v391
        %v396 = vadd.s32 %v392, 1
        %v397 = vsel %vm395, %v396, %v392
        %v398 = vadd.s32 %v393, %v397
        %v399 = vadd.s32 %v398, 536870912
        %v400 = vshrl.u32 %v399, 30
        %v401 = vshll.u32 %v400, 30
        %v402 = vsub.s32 %v398, %v401
        %vm403 = vcmp.lt.s32.totalorder %v402, 0
        %v404 = vsub.s32 0, %v402
        %v405 = vsel %vm403, %v404, %v402
        %v406 = vclz %v405
        %v407 = vsub.s32 %v406, 2
        %vm408 = vcmp.gt.s32.totalorder 0, %v407
        %v409 = vsel %vm408, 0, %v407
        %v410 = vsub.s32 32, %v409
        %v411 = vshll.u32 %v402, %v409
        %v412 = vshrl.u32 %v394, %v410
        %v413 = vor.u32 %v411, %v412
        %v414 = vsub.s32 4294967266, %v409
        %v415 = vadd.s32 %v414, 127
        %v416 = vshll.u32 %v415, 23
        %v417 = vor.u32 4788187, %v416
        %v418 = vand.u32 2147483647, %v417
        %v420 = vcvt.s32.f32 %v413
        %v421 = vmul.f32 %v420, %v418
        %v422 = vxor.u32 %v421, 2147483648
        %v423 = vsel %vm340, %v422, %v421
        %v424 = vsub.s32 4, %v400
        %v425 = vsel %vm340, %v424, %v400
        %v426 = vsel %vm339, %v233, %v423
        %v427 = vsel %vm339, 0, %v425
        %v428 = vcosq.f32.pop %v426
        %v429 = vsinq.f32.pop %v426
        %vm430 = vweird.f32 %v233
        %v431 = vadd.s32 %v427, 3
        %v432 = vand.u32 %v431, 3
        %vm433 = vcmp.lt.s32.totalorder %v432, 2
        %vm434 = vcmp.eq.s32.totalorder %v432, 0
        %v435 = vxor.u32 %v429, 2147483648
        %v436 = vsel %vm434, %v428, %v435
        %vm437 = vcmp.eq.s32.totalorder %v432, 2
        %v438 = vxor.u32 %v428, 2147483648
        %v439 = vsel %vm437, %v438, %v429
        %v440 = vsel %vm433, %v436, %v439
        %v441 = vsel %vm430, nan, %v440
        %v442 = vld [vmem:[%s172] sm:$0xff]
        %v443 = vld [vmem:[%s172 + $0x8] sm:$0xff]
        %v444 = vadd.f32 %v442, %v337
        %v445 = vadd.f32 %v443, %v441
        %446 = vst [vmem:[%s194] sm:$0xff] %v444
        %447 = vst [vmem:[%s194 + $0x8] sm:$0xff] %v445
        %s448 = sand.u32 %s96, 1
        %s449 = scalar_lea.sflag [#allocation4], %s448
        %s450 = sand.u32 %s96, 1
        %s451 = smul.addr %s450, 16
        %s452 = scalar_lea.vmem [#allocation5], %s451
        // Predicated region
        $region37: #{tpu_custom_call.1} parent=31 // pred_check
          %p453 = pneg %p106
        $region38: #{tpu_custom_call.1} parent=31 // pred_check_branch
          %455 = sbr.rel (%p453) target = $region40
        $region39: #{tpu_custom_call.1} parent=31 // pred_region
          %s456 = smul.u32 2, %s20
          %s457 = ssub.s32 3, %s456
          %p458 = scmp.lt.s32.totalorder %s457, 2
          %s459 = scalar_select %p458, %s457, 2
          %s460 = smul.u32 128, %s459
          %s462 = ssub.s32 256, %s460
          %463 = vsyncadd %s449, %s462
          %p464 = scmp.ne.s32.totalorder 0, %s460
          %s465 = smul.addr %s456, 128
          %s466 = scalar_lea.hbm %s3, %s465
          %s467 = smul.u32 8, %s459
          %s468 = sshll.u32 %s452, 4
          %s469 = int_to_ptr.vmem [resolvable:$true] %s468
          %s470 = sshll.u32 %s467, 4
          %474 = dma.vmem_to_hbm [thread:$0]  (%p464), %s469, %s470, %s466, %s449, 128, 128, 8
        $region40: #{tpu_custom_call.1} parent=31 // pred_fallthru
          _
      $region32: #{tpu_custom_call.1} parent=5 // pred_fallthru
        _
      %p475 = scmp.le.s32.totalorder 2, %s15
      // Predicated region
      $region41: #{tpu_custom_call.1} parent=5 // pred_check
        %p476 = pneg %p475
      $region42: #{tpu_custom_call.1} parent=5 // pred_check_branch
        %478 = sbr.rel (%p476) target = $region44
      $region43: #{tpu_custom_call.1} parent=5 // pred_region
        %s479 = ssub.s32 %s15, 2
        // Predicated region
        $region45: #{tpu_custom_call.1} parent=43 // pred_check
          %p480 = pneg %p112
        $region46: #{tpu_custom_call.1} parent=43 // pred_check_branch
          %482 = sbr.rel (%p480) target = $region48
        $region47: #{tpu_custom_call.1} parent=43 // pred_region
          %s483 = sand.u32 %s97, 1
          %s484 = scalar_lea.sflag [#allocation4], %s483
          %s485 = sand.u32 %s97, 1
          %s486 = smul.addr %s485, 16
          %s487 = scalar_lea.vmem [#allocation5], %s486
          %488 = dma.done %s484, 256
        $region48: #{tpu_custom_call.1} parent=43 // pred_fallthru
          _
      $region44: #{tpu_custom_call.1} parent=5 // pred_fallthru
        _
    $region6: #{tpu_custom_call.1} parent=1 // loop_footer
      %s19 = sadd.s32 1, %s15
    $region7: #{tpu_custom_call.1} parent=1 // loop_footer_branch
      %14 = sbr.rel target = $region3
    $region8: #{tpu_custom_call.1} parent=1 // loop_exit
      _
    %489 = vsyncpa [#allocation3], 1
    %s490 = scalar_lea.sflag [#allocation3], 1
    %491 = vsyncpa %s490, 1
    %492 = vsyncpa [#allocation4], 1
    %s493 = scalar_lea.sflag [#allocation4], 1
    %494 = vsyncpa %s493, 1

</llo_original>
